<compile_context>
chip_gen: v7x
topology: tpu7x:2x2x1
jax: 0.10.0
libtpu: 0.0.40
codegen_flags: <defaults>
</compile_context>

<pallas_src>
import jax
import jax.numpy as jnp
from jax.experimental import pallas as pl
from jax.experimental.pallas import tpu as pltpu

EPS = 1e-5


# --------------------------------------------------------------------------- #
# Kernel 1: BN1 (folded FMA) -> ReLU -> 1x1 conv, plus fused partial statistics
# of the conv output (for BN2), streamed over row tiles of (N*H*W, Cin).
# --------------------------------------------------------------------------- #
def _bn_relu_conv1x1_kernel(x_ref, scale_ref, shift_ref, w_ref,
                            t_ref, s_ref, ss_ref):
    # x_ref:(tm,Cin) scale/shift:(1,Cin) w:(Cin,C1) -> t:(tm,C1), stats:(1,8,C1)
    x = x_ref[...]
    z = jnp.maximum(x * scale_ref[...] + shift_ref[...], 0.0)      # folded BN + ReLU
    t = jnp.dot(z, w_ref[...], preferred_element_type=jnp.float32)  # 1x1 conv (MXU)
    t_ref[...] = t

    c1 = t.shape[1]
    tsum = jnp.sum(t, axis=0, keepdims=True).reshape(1, 1, c1)      # (1,1,C1)
    tsq = jnp.sum(t * t, axis=0, keepdims=True).reshape(1, 1, c1)
    # Write the per-tile partial sums into sublane row 0 of an (1,8,C1) block
    # (8 sublanes keep the output block layout-legal); the wrapper sums them.
    row = jax.lax.broadcasted_iota(jnp.int32, (1, 8, c1), 1)
    s_ref[...] = jnp.where(row == 0, tsum, 0.0)
    ss_ref[...] = jnp.where(row == 0, tsq, 0.0)


# --------------------------------------------------------------------------- #
# Kernel 2: BN2 (folded FMA) -> ReLU -> 3x3 conv (pad=1) -> concat with x.
# One image per grid step; the input block carries a zero halo of 1 pixel.
# --------------------------------------------------------------------------- #
def _bn_relu_conv3x3_cat_kernel(tp_ref, x_ref, scale_ref, shift_ref, w_ref, o_ref):
    # tp_ref:(1,H+2,W+2,C1)  x_ref:(1,H,W,Cin)  scale/shift:(1,C1)
    # w_ref:(3,3,C1,Cg)      o_ref:(1,H,W,Cg+Cin)
    _, hp, wp, c1 = tp_ref.shape
    h, w_sz = hp - 2, wp - 2
    cg = w_ref.shape[-1]
    cin = x_ref.shape[-1]

    tpb = tp_ref[...][0]                                    # (H+2, W+2, C1)
    scale = scale_ref[...].reshape(1, 1, c1)
    shift = shift_ref[...].reshape(1, 1, c1)
    z = jnp.maximum(tpb * scale + shift, 0.0)               # folded BN2 + ReLU

    # Re-zero the 1-pixel halo (the BN shift would otherwise leak into padding).
    r = jax.lax.broadcasted_iota(jnp.int32, z.shape, 0)
    c = jax.lax.broadcasted_iota(jnp.int32, z.shape, 1)
    interior = (r >= 1) & (r <= h) & (c >= 1) & (c <= w_sz)
    z = jnp.where(interior, z, 0.0)

    # 3x3 conv as 9 statically-unrolled shifted matmuls on the MXU.
    wgt = w_ref[...]                                        # (3, 3, C1, Cg)
    acc = jnp.zeros((h * w_sz, cg), jnp.float32)
    for dy in range(3):
        for dx in range(3):
            patch = z[dy:dy + h, dx:dx + w_sz, :].reshape(h * w_sz, c1)
            acc = acc + jnp.dot(patch, wgt[dy, dx],
                                preferred_element_type=jnp.float32)

    # Fused channel concat: [conv3x3 output, original x].
    o_ref[:, :, :, 0:cg] = acc.reshape(1, h, w_sz, cg)
    o_ref[:, :, :, cg:cg + cin] = x_ref[...]


def _row_tile(n_rows, target):
    """Largest multiple-of-8 divisor of n_rows that is <= target (fallback: all rows)."""
    top = min(target, n_rows)
    for cand in range(top, 7, -1):
        if n_rows % cand == 0 and cand % 8 == 0:
            return cand
    return n_rows


def bottleneck_forward(x_nchw, g1, b1, w1, g2, b2, w2, *, eps=EPS,
                       row_tile_target=256):
    """DenseNet Bottleneck forward.

    x_nchw: (N, Cin, H, W); w1: (4g, Cin, 1, 1); w2: (g, 4g, 3, 3).
    Returns (N, g + Cin, H, W) = cat([bottleneck(x), x], channel dim).
    """
    N, Cin, H, W = x_nchw.shape
    C1 = w1.shape[0]          # 4 * growth_rate
    Cg = w2.shape[0]          # growth_rate
    nhw = N * H * W

    # NCHW -> NHWC (channels on the TPU lane dimension).
    # TODO(synk): if the surrounding model is already channels-last, drop these
    # transposes -- for a memory-bound block they are pure extra HBM traffic.
    x = jnp.transpose(x_nchw, (0, 2, 3, 1)).astype(jnp.float32)      # (N,H,W,Cin)
    xf = x.reshape(nhw, Cin)

    w1m = jnp.transpose(w1.reshape(C1, Cin), (1, 0)).astype(jnp.float32)  # (Cin,C1)
    w2m = jnp.transpose(w2, (2, 3, 1, 0)).astype(jnp.float32)             # (3,3,C1,Cg)

    # ---- BN1: one-pass batch stats (cheap XLA reduction), folded into FMA ----
    s1 = jnp.sum(xf, axis=0)
    ss1 = jnp.sum(xf * xf, axis=0)
    mean1 = s1 / nhw
    var1 = jnp.maximum(ss1 / nhw - mean1 * mean1, 0.0)
    scale1_v = g1.astype(jnp.float32) * jax.lax.rsqrt(var1 + eps)
    shift1_v = b1.astype(jnp.float32) - mean1 * scale1_v
    scale1 = scale1_v.reshape(1, Cin)
    shift1 = shift1_v.reshape(1, Cin)

    # ---- Kernel 1: BN1-FMA + ReLU + 1x1 conv, streaming row tiles ----
    tm = _row_tile(nhw, row_tile_target)
    n_tiles = nhw // tm
    t, ps, pss = pl.pallas_call(
        _bn_relu_conv1x1_kernel,
        grid=(n_tiles,),
        in_specs=[
            pl.BlockSpec((tm, Cin), lambda i: (i, 0)),
            pl.BlockSpec((1, Cin), lambda i: (0, 0)),
            pl.BlockSpec((1, Cin), lambda i: (0, 0)),
            pl.BlockSpec((Cin, C1), lambda i: (0, 0)),
        ],
        out_specs=[
            pl.BlockSpec((tm, C1), lambda i: (i, 0)),
            pl.BlockSpec((1, 8, C1), lambda i: (i, 0, 0)),
            pl.BlockSpec((1, 8, C1), lambda i: (i, 0, 0)),
        ],
        out_shape=(
            jax.ShapeDtypeStruct((nhw, C1), jnp.float32),
            jax.ShapeDtypeStruct((n_tiles, 8, C1), jnp.float32),
            jax.ShapeDtypeStruct((n_tiles, 8, C1), jnp.float32),
        ),
        compiler_params=pltpu.CompilerParams(
            dimension_semantics=("parallel",),
            vmem_limit_bytes=32 * 1024 * 1024),
    )(xf, scale1, shift1, w1m)

    # ---- BN2 from the fused partial sums (no extra HBM pass over t) ----
    tot = jnp.sum(ps, axis=(0, 1))
    tot_sq = jnp.sum(pss, axis=(0, 1))
    mean2 = tot / nhw
    var2 = jnp.maximum(tot_sq / nhw - mean2 * mean2, 0.0)
    scale2_v = g2.astype(jnp.float32) * jax.lax.rsqrt(var2 + eps)
    shift2_v = b2.astype(jnp.float32) - mean2 * scale2_v
    scale2 = scale2_v.reshape(1, C1)
    shift2 = shift2_v.reshape(1, C1)

    # Zero halo for the 3x3 convolution (padding=1); kernel 2 re-zeros the halo
    # after BN2+ReLU so it behaves exactly like PyTorch's zero padding.
    tp = jnp.pad(t.reshape(N, H, W, C1), ((0, 0), (1, 1), (1, 1), (0, 0)))

    # ---- Kernel 2: BN2-FMA + ReLU + 3x3 conv + concat, one image per step ----
    out_nhwc = pl.pallas_call(
        _bn_relu_conv3x3_cat_kernel,
        grid=(N,),
        in_specs=[
            pl.BlockSpec((1, H + 2, W + 2, C1), lambda n: (n, 0, 0, 0)),
            pl.BlockSpec((1, H, W, Cin), lambda n: (n, 0, 0, 0)),
            pl.BlockSpec((1, C1), lambda n: (0, 0)),
            pl.BlockSpec((1, C1), lambda n: (0, 0)),
            pl.BlockSpec((3, 3, C1, Cg), lambda n: (0, 0, 0, 0)),
        ],
        out_specs=pl.BlockSpec((1, H, W, Cg + Cin), lambda n: (n, 0, 0, 0)),
        out_shape=jax.ShapeDtypeStruct((N, H, W, Cg + Cin), jnp.float32),
        compiler_params=pltpu.CompilerParams(
            dimension_semantics=("parallel",),
            vmem_limit_bytes=32 * 1024 * 1024),
    )(tp, x, scale2, shift2, w2m)

    return jnp.transpose(out_nhwc, (0, 3, 1, 2))               # back to NCHW


# --------------------------------------------------------------------------- #
# Pure-JAX reference (NCHW), mirroring the PyTorch forward in training mode.
# --------------------------------------------------------------------------- #
def bottleneck_ref(x, g1, b1, w1, g2, b2, w2, eps=EPS):
    def bn(v, g, b):
        m = jnp.mean(v, axis=(0, 2, 3), keepdims=True)
        va = jnp.mean((v - m) ** 2, axis=(0, 2, 3), keepdims=True)
        return ((v - m) / jnp.sqrt(va + eps)) * g[None, :, None, None] \
            + b[None, :, None, None]

    dn = ('NCHW', 'OIHW', 'NCHW')
    h = jnp.maximum(bn(x, g1, b1), 0.0)
    h = jax.lax.conv_general_dilated(h, w1, (1, 1), 'VALID', dimension_numbers=dn)
    h = jnp.maximum(bn(h, g2, b2), 0.0)
    h = jax.lax.conv_general_dilated(h, w2, (1, 1), ((1, 1), (1, 1)),
                                     dimension_numbers=dn)
    return jnp.concatenate([h, x], axis=1)


if __name__ == "__main__":
    N, Cin, H, W = 2, 16, 16, 16
    growth = 8
    C1 = 4 * growth          # 32
    Cg = growth              # 8

    key = jax.random.PRNGKey(0)
    kx, kg1, kb1, kw1, kg2, kb2, kw2 = jax.random.split(key, 7)

    x = jax.random.normal(kx, (N, Cin, H, W), dtype=jnp.float32)
    g1 = 1.0 + 0.1 * jax.random.normal(kg1, (Cin,), dtype=jnp.float32)
    b1 = 0.1 * jax.random.normal(kb1, (Cin,), dtype=jnp.float32)
    w1 = jax.random.normal(kw1, (C1, Cin, 1, 1), dtype=jnp.float32) / jnp.sqrt(Cin)
    g2 = 1.0 + 0.1 * jax.random.normal(kg2, (C1,), dtype=jnp.float32)
    b2 = 0.1 * jax.random.normal(kb2, (C1,), dtype=jnp.float32)
    w2 = jax.random.normal(kw2, (Cg, C1, 3, 3), dtype=jnp.float32) / jnp.sqrt(9 * C1)

    out = bottleneck_forward(x, g1, b1, w1, g2, b2, w2)
    out = jax.block_until_ready(out)

    ref = bottleneck_ref(x, g1, b1, w1, g2, b2, w2)
    assert out.shape == (N, Cg + Cin, H, W), out.shape
    assert jnp.allclose(out, ref, atol=1e-3, rtol=1e-3), \
        float(jnp.max(jnp.abs(out - ref)))

    print("KERNEL_OK")
</pallas_src>

<mosaic_0001>
module attributes {stable_mosaic.version = 11 : i64} {
  func.func @_bn_relu_conv1x1_kernel(%arg0: i32, %arg1: memref<256x16xf32, #tpu.memory_space<vmem>>, %arg2: memref<1x16xf32, #tpu.memory_space<vmem>>, %arg3: memref<1x16xf32, #tpu.memory_space<vmem>>, %arg4: memref<16x32xf32, #tpu.memory_space<vmem>>, %arg5: memref<256x32xf32, #tpu.memory_space<vmem>>, %arg6: memref<1x8x32xf32, #tpu.memory_space<vmem>>, %arg7: memref<1x8x32xf32, #tpu.memory_space<vmem>>) attributes {dimension_semantics = [#tpu.dimension_semantics<parallel>], iteration_bounds = array<i64: 2>, scalar_prefetch = 0 : i64, scratch_operands = 0 : i64, tpu.core_type = #tpu.core_type<tc>, window_params = [{transform_indices = @transform_0, window_bounds = array<i64: 256, 16>}, {pipeline_mode = #tpu.pipeline_mode<synchronous>, transform_indices = @transform_1, window_bounds = array<i64: 1, 16>}, {pipeline_mode = #tpu.pipeline_mode<synchronous>, transform_indices = @transform_2, window_bounds = array<i64: 1, 16>}, {pipeline_mode = #tpu.pipeline_mode<synchronous>, transform_indices = @transform_3, window_bounds = array<i64: 16, 32>}, {transform_indices = @transform_4, window_bounds = array<i64: 256, 32>}, {transform_indices = @transform_5, window_bounds = array<i64: 1, 8, 32>}, {transform_indices = @transform_6, window_bounds = array<i64: 1, 8, 32>}]} {
    %c0 = arith.constant 0 : index
    %c0_0 = arith.constant 0 : index
    %0 = vector.load %arg1[%c0, %c0_0] : memref<256x16xf32, #tpu.memory_space<vmem>>, vector<256x16xf32>
    %c0_1 = arith.constant 0 : index
    %c0_2 = arith.constant 0 : index
    %1 = vector.load %arg2[%c0_1, %c0_2] : memref<1x16xf32, #tpu.memory_space<vmem>>, vector<1x16xf32>
    %2 = vector.broadcast %1 : vector<1x16xf32> to vector<256x16xf32>
    %3 = arith.mulf %0, %2 : vector<256x16xf32>
    %c0_3 = arith.constant 0 : index
    %c0_4 = arith.constant 0 : index
    %4 = vector.load %arg3[%c0_3, %c0_4] : memref<1x16xf32, #tpu.memory_space<vmem>>, vector<1x16xf32>
    %5 = vector.broadcast %4 : vector<1x16xf32> to vector<256x16xf32>
    %6 = arith.addf %3, %5 : vector<256x16xf32>
    %cst = arith.constant 0.000000e+00 : f32
    %7 = vector.broadcast %cst : f32 to vector<256x16xf32>
    %8 = arith.maximumf %6, %7 : vector<256x16xf32>
    %c0_5 = arith.constant 0 : index
    %c0_6 = arith.constant 0 : index
    %9 = vector.load %arg4[%c0_5, %c0_6] : memref<16x32xf32, #tpu.memory_space<vmem>>, vector<16x32xf32>
    %cst_7 = arith.constant dense<0.000000e+00> : vector<256x32xf32>
    %10 = tpu.matmul %8, %9, %cst_7 {dimension_numbers = #tpu.dot_dimension_numbers<[1], [0], [0], [1], [0, 0, 1, 1], [], []>} : vector<256x16xf32>, vector<16x32xf32>, vector<256x32xf32> -> vector<256x32xf32>
    %c0_8 = arith.constant 0 : index
    %c0_9 = arith.constant 0 : index
    %11 = vector.load %arg5[%c0_8, %c0_9] : memref<256x32xf32, #tpu.memory_space<vmem>>, vector<256x32xf32>
    tpu.vector_store %arg5[%c0_8, %c0_9], %10 {strides = array<i32>} : memref<256x32xf32, #tpu.memory_space<vmem>>, vector<256x32xf32>,
    %cst_10 = arith.constant dense<0.000000e+00> : vector<32xf32>
    %12 = vector.multi_reduction <add>, %10, %cst_10 [0] : vector<256x32xf32> to vector<32xf32>
    %13 = vector.shape_cast %12 : vector<32xf32> to vector<1x32xf32>
    %14 = vector.shape_cast %13 : vector<1x32xf32> to vector<1x1x32xf32>
    %15 = arith.mulf %10, %10 : vector<256x32xf32>
    %cst_11 = arith.constant dense<0.000000e+00> : vector<32xf32>
    %16 = vector.multi_reduction <add>, %15, %cst_11 [0] : vector<256x32xf32> to vector<32xf32>
    %17 = vector.shape_cast %16 : vector<32xf32> to vector<1x32xf32>
    %18 = vector.shape_cast %17 : vector<1x32xf32> to vector<1x1x32xf32>
    %19 = tpu.iota {dimensions = array<i32: 1>} : vector<1x8x32xi32>
    %c0_i32 = arith.constant 0 : i32
    %20 = vector.broadcast %c0_i32 : i32 to vector<1x8x32xi32>
    %21 = arith.cmpi eq, %19, %20 : vector<1x8x32xi32>
    %cst_12 = arith.constant 0.000000e+00 : f32
    %22 = vector.shape_cast %14 : vector<1x1x32xf32> to vector<1x1x32xf32>
    %23 = vector.broadcast %22 : vector<1x1x32xf32> to vector<1x8x32xf32>
    %24 = vector.broadcast %cst_12 : f32 to vector<1x8x32xf32>
    %25 = arith.select %21, %23, %24 : vector<1x8x32xi1>, vector<1x8x32xf32>
    %c0_13 = arith.constant 0 : index
    %c0_14 = arith.constant 0 : index
    %c0_15 = arith.constant 0 : index
    %26 = vector.load %arg6[%c0_13, %c0_14, %c0_15] : memref<1x8x32xf32, #tpu.memory_space<vmem>>, vector<1x8x32xf32>
    tpu.vector_store %arg6[%c0_13, %c0_14, %c0_15], %25 {strides = array<i32>} : memref<1x8x32xf32, #tpu.memory_space<vmem>>, vector<1x8x32xf32>,
    %c0_i32_16 = arith.constant 0 : i32
    %27 = vector.broadcast %c0_i32_16 : i32 to vector<1x8x32xi32>
    %28 = arith.cmpi eq, %19, %27 : vector<1x8x32xi32>
    %cst_17 = arith.constant 0.000000e+00 : f32
    %29 = vector.shape_cast %18 : vector<1x1x32xf32> to vector<1x1x32xf32>
    %30 = vector.broadcast %29 : vector<1x1x32xf32> to vector<1x8x32xf32>
    %31 = vector.broadcast %cst_17 : f32 to vector<1x8x32xf32>
    %32 = arith.select %28, %30, %31 : vector<1x8x32xi1>, vector<1x8x32xf32>
    %c0_18 = arith.constant 0 : index
    %c0_19 = arith.constant 0 : index
    %c0_20 = arith.constant 0 : index
    %33 = vector.load %arg7[%c0_18, %c0_19, %c0_20] : memref<1x8x32xf32, #tpu.memory_space<vmem>>, vector<1x8x32xf32>
    tpu.vector_store %arg7[%c0_18, %c0_19, %c0_20], %32 {strides = array<i32>} : memref<1x8x32xf32, #tpu.memory_space<vmem>>, vector<1x8x32xf32>,
    return
  }
  func.func @transform_0(%arg0: i32) -> (i32, i32) {
    %c0_i32 = arith.constant 0 : i32
    %c0_i32_0 = arith.constant 0 : i32
    return %arg0, %c0_i32 : i32, i32
  }
  func.func @transform_1(%arg0: i32) -> (i32, i32) {
    %c0_i32 = arith.constant 0 : i32
    %c0_i32_0 = arith.constant 0 : i32
    %c0_i32_1 = arith.constant 0 : i32
    return %c0_i32, %c0_i32_0 : i32, i32
  }
  func.func @transform_2(%arg0: i32) -> (i32, i32) {
    %c0_i32 = arith.constant 0 : i32
    %c0_i32_0 = arith.constant 0 : i32
    %c0_i32_1 = arith.constant 0 : i32
    return %c0_i32, %c0_i32_0 : i32, i32
  }
  func.func @transform_3(%arg0: i32) -> (i32, i32) {
    %c0_i32 = arith.constant 0 : i32
    %c0_i32_0 = arith.constant 0 : i32
    %c0_i32_1 = arith.constant 0 : i32
    return %c0_i32, %c0_i32_0 : i32, i32
  }
  func.func @transform_4(%arg0: i32) -> (i32, i32) {
    %c0_i32 = arith.constant 0 : i32
    %c0_i32_0 = arith.constant 0 : i32
    return %arg0, %c0_i32 : i32, i32
  }
  func.func @transform_5(%arg0: i32) -> (i32, i32, i32) {
    %c0_i32 = arith.constant 0 : i32
    %c0_i32_0 = arith.constant 0 : i32
    %c0_i32_1 = arith.constant 0 : i32
    return %arg0, %c0_i32, %c0_i32_0 : i32, i32, i32
  }
  func.func @transform_6(%arg0: i32) -> (i32, i32, i32) {
    %c0_i32 = arith.constant 0 : i32
    %c0_i32_0 = arith.constant 0 : i32
    %c0_i32_1 = arith.constant 0 : i32
    return %arg0, %c0_i32, %c0_i32_0 : i32, i32, i32
  }
}

</mosaic_0001>

<llo_original>
// kernel: tpu_custom_call.1
$region0: #{tpu_custom_call.1}
  #allocation0 [shape = 'u32[]', space=smem, size = 0x4, offset = 0x4, fixed_abs, tag = 'smem constant byte address 0x4 - core index']
  #allocation1 [shape = 'u32[144,128]{1,0:T(1,128)}', space=vmem, size = 0x12000, scoped, tag = 'internal scratch']
  %s0 = inlined_call_operand.vmem [shape: f32[512,16], index: 0, kind: input, shape index: {}]
  %s1 = inlined_call_operand.vmem [shape: f32[1,16], index: 1, kind: input, shape index: {}]
  %s2 = inlined_call_operand.vmem [shape: f32[1,16], index: 2, kind: input, shape index: {}]
  %s3 = inlined_call_operand.vmem [shape: f32[16,32], index: 3, kind: input, shape index: {}]
  %s4 = inlined_call_operand.vmem [shape: f32[512,32], index: 4, kind: output, shape index: {0}]
  %s5 = inlined_call_operand.hbm [shape: f32[2,8,32], index: 5, kind: output, shape index: {1}]
  %s6 = inlined_call_operand.hbm [shape: f32[2,8,32], index: 6, kind: output, shape index: {2}]
  %7 = xla_tuple %s4, %s5, %s6
  %s8 = sld [smem:[#allocation0]]
  $region65: #{tpu_custom_call.1} parent=0
    _
  %s10 = ssub.s32 1, %s8
  %s11 = scalar_select 0, %s10, %s8
  $region1: #{tpu_custom_call.1} parent=0
    #allocation2 [shape = 'u8[8192]{0}', space=vmem, size = 0x2000, scoped, tag = 'output window, operand 1']
    #allocation3 [shape = 's32[2]{0}', space=sflag, size = 0x8, scoped, tag = 'scoped memory for tpu_custom_call.1']
    #allocation4 [shape = 'u8[8192]{0}', space=vmem, size = 0x2000, scoped, tag = 'output window, operand 2']
    #allocation5 [shape = 's32[2]{0}', space=sflag, size = 0x8, scoped, tag = 'scoped memory for tpu_custom_call.1']
    %12 = vsyncpa [#allocation3], 0
    %s13 = scalar_lea.sflag [#allocation3], 1
    %14 = vsyncpa %s13, 0
    %15 = vsyncpa [#allocation5], 0
    %s16 = scalar_lea.sflag [#allocation5], 1
    %17 = vsyncpa %s16, 0
    loop: start=0, step=1, limit=4
    $region2: #{tpu_custom_call.1} parent=1 // loop_pre_header
      _
    $region3: #{tpu_custom_call.1} parent=1 // loop_header
      %s19 = sphi 0, %s23
      %p20 = scmp.ge.s32.totalorder %s19, 4
      %s29 = sphi 0, %s31
      %s32 = sphi 0, %s29
      %s33 = sphi 0, %s32
      %s49 = sphi 0, %s33
      %s53 = sphi 0, %s53
      %s55 = sphi 0, %s53
      %s56 = sphi 0, %s55
      %s70 = sphi 0, %s56
      %s74 = sphi 0, %s74
      %s76 = sphi 0, %s74
      %s77 = sphi 0, %s76
      %s91 = sphi 0, %s77
      %s95 = sphi 0, %s95
      %s97 = sphi 0, %s95
      %s98 = sphi 0, %s97
      %s112 = sphi 0, %s98
      %s118 = sphi 0, %s120
      %s121 = sphi 0, %s118
      %s122 = sphi 0, %s121
      %s138 = sphi 0, %s122
      %s144 = sphi 0, %s146
      %s147 = sphi 0, %s144
      %s148 = sphi 0, %s147
      %s164 = sphi 0, %s148
      %s170 = sphi 0, %s172
      %s173 = sphi 0, %s170
      %s174 = sphi 0, %s173
      %s190 = sphi 0, %s174
    $region4: #{tpu_custom_call.1} parent=1 // loop_header_branch
      %22 = sbr.rel (%p20) target = $region8
    $region5: #{tpu_custom_call.1} parent=1 // loop_body
      %s24 = ssub.s32 %s19, 1
      %s25 = ssub.s32 %s19, 2
      %s26 = sadd.s32 %s19, 1
      %s27 = ssub.s32 %s19, %s26
      %p28 = scmp.eq.s32.totalorder %s27, 0
      %s30 = sadd.s32 %s29, 1
      %s31 = scalar_select %p28, %s29, %s30
      %p34 = pneg %p28
      %p35 = scmp.eq.s32.totalorder %s19, 1
      %p36 = por %p34, %p35
      %p37 = scmp.ne.s32.totalorder %s29, %s32
      %p38 = scmp.eq.s32.totalorder %s19, 0
      %p39 = por %p37, %p38
      %p40 = scmp.ne.s32.totalorder %s29, %s32
      %p41 = scmp.eq.s32.totalorder %s24, 1
      %p42 = por %p40, %p41
      %p43 = scmp.ne.s32.totalorder %s32, %s33
      %p44 = scmp.eq.s32.totalorder %s24, 0
      %p45 = por %p43, %p44
      %p46 = scmp.ne.s32.totalorder %s32, %s33
      %p47 = scmp.eq.s32.totalorder %s25, 1
      %p48 = por %p46, %p47
      %p50 = scmp.ne.s32.totalorder %s33, %s49
      %p51 = scmp.eq.s32.totalorder %s25, 0
      %p52 = por %p50, %p51
      %s54 = sadd.s32 %s53, 1
      %p57 = scmp.eq.s32.totalorder %s19, 1
      %p58 = scmp.ne.s32.totalorder %s53, %s55
      %p59 = scmp.eq.s32.totalorder %s19, 0
      %p60 = por %p58, %p59
      %p61 = scmp.ne.s32.totalorder %s53, %s55
      %p62 = scmp.eq.s32.totalorder %s24, 1
      %p63 = por %p61, %p62
      %p64 = scmp.ne.s32.totalorder %s55, %s56
      %p65 = scmp.eq.s32.totalorder %s24, 0
      %p66 = por %p64, %p65
      %p67 = scmp.ne.s32.totalorder %s55, %s56
      %p68 = scmp.eq.s32.totalorder %s25, 1
      %p69 = por %p67, %p68
      %p71 = scmp.ne.s32.totalorder %s56, %s70
      %p72 = scmp.eq.s32.totalorder %s25, 0
      %p73 = por %p71, %p72
      %s75 = sadd.s32 %s74, 1
      %p78 = scmp.eq.s32.totalorder %s19, 1
      %p79 = scmp.ne.s32.totalorder %s74, %s76
      %p80 = scmp.eq.s32.totalorder %s19, 0
      %p81 = por %p79, %p80
      %p82 = scmp.ne.s32.totalorder %s74, %s76
      %p83 = scmp.eq.s32.totalorder %s24, 1
      %p84 = por %p82, %p83
      %p85 = scmp.ne.s32.totalorder %s76, %s77
      %p86 = scmp.eq.s32.totalorder %s24, 0
      %p87 = por %p85, %p86
      %p88 = scmp.ne.s32.totalorder %s76, %s77
      %p89 = scmp.eq.s32.totalorder %s25, 1
      %p90 = por %p88, %p89
      %p92 = scmp.ne.s32.totalorder %s77, %s91
      %p93 = scmp.eq.s32.totalorder %s25, 0
      %p94 = por %p92, %p93
      %s96 = sadd.s32 %s95, 1
      %p99 = scmp.eq.s32.totalorder %s19, 1
      %p100 = scmp.ne.s32.totalorder %s95, %s97
      %p101 = scmp.eq.s32.totalorder %s19, 0
      %p102 = por %p100, %p101
      %p103 = scmp.ne.s32.totalorder %s95, %s97
      %p104 = scmp.eq.s32.totalorder %s24, 1
      %p105 = por %p103, %p104
      %p106 = scmp.ne.s32.totalorder %s97, %s98
      %p107 = scmp.eq.s32.totalorder %s24, 0
      %p108 = por %p106, %p107
      %p109 = scmp.ne.s32.totalorder %s97, %s98
      %p110 = scmp.eq.s32.totalorder %s25, 1
      %p111 = por %p109, %p110
      %p113 = scmp.ne.s32.totalorder %s98, %s112
      %p114 = scmp.eq.s32.totalorder %s25, 0
      %p115 = por %p113, %p114
      %s116 = ssub.s32 %s19, %s26
      %p117 = scmp.eq.s32.totalorder %s116, 0
      %s119 = sadd.s32 %s118, 1
      %s120 = scalar_select %p117, %s118, %s119
      %p123 = pneg %p117
      %p124 = scmp.eq.s32.totalorder %s19, 1
      %p125 = por %p123, %p124
      %p126 = scmp.ne.s32.totalorder %s118, %s121
      %p127 = scmp.eq.s32.totalorder %s19, 0
      %p128 = por %p126, %p127
      %p129 = scmp.ne.s32.totalorder %s118, %s121
      %p130 = scmp.eq.s32.totalorder %s24, 1
      %p131 = por %p129, %p130
      %p132 = scmp.ne.s32.totalorder %s121, %s122
      %p133 = scmp.eq.s32.totalorder %s24, 0
      %p134 = por %p132, %p133
      %p135 = scmp.ne.s32.totalorder %s121, %s122
      %p136 = scmp.eq.s32.totalorder %s25, 1
      %p137 = por %p135, %p136
      %p139 = scmp.ne.s32.totalorder %s122, %s138
      %p140 = scmp.eq.s32.totalorder %s25, 0
      %p141 = por %p139, %p140
      %s142 = ssub.s32 %s19, %s26
      %p143 = scmp.eq.s32.totalorder %s142, 0
      %s145 = sadd.s32 %s144, 1
      %s146 = scalar_select %p143, %s144, %s145
      %p149 = pneg %p143
      %p150 = scmp.eq.s32.totalorder %s19, 1
      %p151 = por %p149, %p150
      %p152 = scmp.ne.s32.totalorder %s144, %s147
      %p153 = scmp.eq.s32.totalorder %s19, 0
      %p154 = por %p152, %p153
      %p155 = scmp.ne.s32.totalorder %s144, %s147
      %p156 = scmp.eq.s32.totalorder %s24, 1
      %p157 = por %p155, %p156
      %p158 = scmp.ne.s32.totalorder %s147, %s148
      %p159 = scmp.eq.s32.totalorder %s24, 0
      %p160 = por %p158, %p159
      %p161 = scmp.ne.s32.totalorder %s147, %s148
      %p162 = scmp.eq.s32.totalorder %s25, 1
      %p163 = por %p161, %p162
      %p165 = scmp.ne.s32.totalorder %s148, %s164
      %p166 = scmp.eq.s32.totalorder %s25, 0
      %p167 = por %p165, %p166
      %s168 = ssub.s32 %s19, %s26
      %p169 = scmp.eq.s32.totalorder %s168, 0
      %s171 = sadd.s32 %s170, 1
      %s172 = scalar_select %p169, %s170, %s171
      %p175 = pneg %p169
      %p176 = scmp.eq.s32.totalorder %s19, 1
      %p177 = por %p175, %p176
      %p178 = scmp.ne.s32.totalorder %s170, %s173
      %p179 = scmp.eq.s32.totalorder %s19, 0
      %p180 = por %p178, %p179
      %p181 = scmp.ne.s32.totalorder %s170, %s173
      %p182 = scmp.eq.s32.totalorder %s24, 1
      %p183 = por %p181, %p182
      %p184 = scmp.ne.s32.totalorder %s173, %s174
      %p185 = scmp.eq.s32.totalorder %s24, 0
      %p186 = por %p184, %p185
      %p187 = scmp.ne.s32.totalorder %s173, %s174
      %p188 = scmp.eq.s32.totalorder %s25, 1
      %p189 = por %p187, %p188
      %p191 = scmp.ne.s32.totalorder %s174, %s190
      %p192 = scmp.eq.s32.totalorder %s25, 0
      %p193 = por %p191, %p192
      %p194 = scmp.le.s32.totalorder 1, %s19
      %p195 = scmp.lt.s32.totalorder %s19, 3
      %p196 = pnand %p194, %p195
      %p197 = pneg %p196
      // Predicated region
      $region9: #{tpu_custom_call.1} parent=5 // pred_check
        _
      $region10: #{tpu_custom_call.1} parent=5 // pred_check_branch
        %199 = sbr.rel (%p196) target = $region12
      $region11: #{tpu_custom_call.1} parent=5 // pred_region
        %s200 = ssub.s32 %s19, 1
        // Predicated region
        $region13: #{tpu_custom_call.1} parent=11 // pred_check
          %p201 = pneg %p66
        $region14: #{tpu_custom_call.1} parent=11 // pred_check_branch
          %203 = sbr.rel (%p201) target = $region16
        $region15: #{tpu_custom_call.1} parent=11 // pred_region
          _
        $region16: #{tpu_custom_call.1} parent=11 // pred_fallthru
          _
        // Predicated region
        $region17: #{tpu_custom_call.1} parent=11 // pred_check
          %p204 = pneg %p87
        $region18: #{tpu_custom_call.1} parent=11 // pred_check_branch
          %206 = sbr.rel (%p204) target = $region20
        $region19: #{tpu_custom_call.1} parent=11 // pred_region
          _
        $region20: #{tpu_custom_call.1} parent=11 // pred_fallthru
          _
        // Predicated region
        $region21: #{tpu_custom_call.1} parent=11 // pred_check
          %p207 = pneg %p108
        $region22: #{tpu_custom_call.1} parent=11 // pred_check_branch
          %209 = sbr.rel (%p207) target = $region24
        $region23: #{tpu_custom_call.1} parent=11 // pred_region
          _
        $region24: #{tpu_custom_call.1} parent=11 // pred_fallthru
          _
      $region12: #{tpu_custom_call.1} parent=5 // pred_fallthru
        _
      %p210 = scmp.lt.s32.totalorder %s19, 2
      // Predicated region
      $region25: #{tpu_custom_call.1} parent=5 // pred_check
        %p211 = pneg %p210
      $region26: #{tpu_custom_call.1} parent=5 // pred_check_branch
        %213 = sbr.rel (%p211) target = $region28
      $region27: #{tpu_custom_call.1} parent=5 // pred_region
        // Predicated region
        $region29: #{tpu_custom_call.1} parent=27 // pred_check
          %p214 = pneg %p39
        $region30: #{tpu_custom_call.1} parent=27 // pred_check_branch
          %216 = sbr.rel (%p214) target = $region32
        $region31: #{tpu_custom_call.1} parent=27 // pred_region
          %s217 = smul.u32 32, %s19
          %p218 = scmp.lt.s32.totalorder %s217, 63
          %s219 = scalar_select %p218, %s217, 63
          %s220 = smul.addr %s219, 8
          %s221 = scalar_lea.vmem %s0, %s220
          %s222 = smul.u32 32, %s19
        $region32: #{tpu_custom_call.1} parent=27 // pred_fallthru
          _
      $region28: #{tpu_custom_call.1} parent=5 // pred_fallthru
        _
      %p223 = scmp.le.s32.totalorder 1, %s19
      %p224 = scmp.lt.s32.totalorder %s19, 3
      %p225 = pnand %p223, %p224
      %p226 = pneg %p225
      // Predicated region
      $region33: #{tpu_custom_call.1} parent=5 // pred_check
        _
      $region34: #{tpu_custom_call.1} parent=5 // pred_check_branch
        %228 = sbr.rel (%p225) target = $region36
      $region35: #{tpu_custom_call.1} parent=5 // pred_region
        %s229 = ssub.s32 %s19, 1
        %s230 = smul.u32 32, %s24
        %p231 = scmp.lt.s32.totalorder %s230, 63
        %s232 = scalar_select %p231, %s230, 63
        %s233 = smul.addr %s232, 8
        %s234 = scalar_lea.vmem %s0, %s233
        %p235 = pneg %p45
        %p236 = pneg %p42
        %p237 = pneg %p66
        %p238 = pneg %p63
        %p239 = pneg %p87
        %p240 = pneg %p84
        %p241 = pneg %p108
        %p242 = pneg %p105
        %p243 = pneg %p134
        %p244 = pneg %p131
        %s245 = smul.u32 32, %s24
        %p246 = scmp.lt.s32.totalorder %s245, 63
        %s247 = scalar_select %p246, %s245, 63
        %s248 = smul.addr %s247, 8
        %s249 = scalar_lea.vmem %s4, %s248
        %p250 = pneg %p160
        %p251 = pneg %p157
        %s252 = sand.u32 %s147, 1
        %s253 = scalar_lea.sflag [#allocation3], %s252
        %s254 = sand.u32 %s147, 1
        %s255 = smul.addr %s254, 8
        %s256 = scalar_lea.vmem [#allocation2], %s255
        %p257 = pneg %p186
        %p258 = pneg %p183
        %s259 = sand.u32 %s173, 1
        %s260 = scalar_lea.sflag [#allocation5], %s259
        %s261 = sand.u32 %s173, 1
        %s262 = smul.addr %s261, 8
        %s263 = scalar_lea.vmem [#allocation4], %s262
        %s264 = smul.u32 32, %s24
        %p265 = scmp.lt.s32.totalorder %s264, 63
        %s266 = scalar_select %p265, %s264, 63
        %s267 = smul.addr %s266, 8
        %s268 = scalar_lea.vmem %s0, %s267
        %s269 = smul.u32 32, %s24
        %s270 = smul.u32 32, %s24
        %p271 = scmp.lt.s32.totalorder %s270, 63
        %s272 = scalar_select %p271, %s270, 63
        %s273 = smul.addr %s272, 8
        %s274 = scalar_lea.vmem %s4, %s273
        %s275 = smul.u32 32, %s24
        %v276 = vld [vmem:[%s268] sm:$0xff]
        %v277 = vld [vmem:[%s268 + $0x8] sm:$0xff]
        %v278 = vld [vmem:[%s268 + $0x10] sm:$0xff]
        %v279 = vld [vmem:[%s268 + $0x18] sm:$0xff]
        %v280 = vld [vmem:[%s268 + $0x20] sm:$0xff]
        %v281 = vld [vmem:[%s268 + $0x28] sm:$0xff]
        %v282 = vld [vmem:[%s268 + $0x30] sm:$0xff]
        %v283 = vld [vmem:[%s268 + $0x38] sm:$0xff]
        %v284 = vld [vmem:[%s268 + $0x40] sm:$0xff]
        %v285 = vld [vmem:[%s268 + $0x48] sm:$0xff]
        %v286 = vld [vmem:[%s268 + $0x50] sm:$0xff]
        %v287 = vld [vmem:[%s268 + $0x58] sm:$0xff]
        %v288 = vld [vmem:[%s268 + $0x60] sm:$0xff]
        %v289 = vld [vmem:[%s268 + $0x68] sm:$0xff]
        %v290 = vld [vmem:[%s268 + $0x70] sm:$0xff]
        %v291 = vld [vmem:[%s268 + $0x78] sm:$0xff]
        %v292 = vld [vmem:[%s268 + $0x80] sm:$0xff]
        %v293 = vld [vmem:[%s268 + $0x88] sm:$0xff]
        %v294 = vld [vmem:[%s268 + $0x90] sm:$0xff]
        %v295 = vld [vmem:[%s268 + $0x98] sm:$0xff]
        %v296 = vld [vmem:[%s268 + $0xa0] sm:$0xff]
        %v297 = vld [vmem:[%s268 + $0xa8] sm:$0xff]
        %v298 = vld [vmem:[%s268 + $0xb0] sm:$0xff]
        %v299 = vld [vmem:[%s268 + $0xb8] sm:$0xff]
        %v300 = vld [vmem:[%s268 + $0xc0] sm:$0xff]
        %v301 = vld [vmem:[%s268 + $0xc8] sm:$0xff]
        %v302 = vld [vmem:[%s268 + $0xd0] sm:$0xff]
        %v303 = vld [vmem:[%s268 + $0xd8] sm:$0xff]
        %v304 = vld [vmem:[%s268 + $0xe0] sm:$0xff]
        %v305 = vld [vmem:[%s268 + $0xe8] sm:$0xff]
        %v306 = vld [vmem:[%s268 + $0xf0] sm:$0xff]
        %v307 = vld [vmem:[%s268 + $0xf8] sm:$0xff]
        %v308 = vld [vmem:[%s1] sm:$0x1]
        %v310 = vlaneseq
        %v311 = vshrl.u32 %v310, 7
        %v312 = vsub.s32 0, %v311
        %v313 = vrot.slane %v308, %v312
        %v315 = vmul.f32 %v276, %v313
        %v316 = vmul.f32 %v277, %v313
        %v317 = vmul.f32 %v278, %v313
        %v318 = vmul.f32 %v279, %v313
        %v319 = vmul.f32 %v280, %v313
        %v320 = vmul.f32 %v281, %v313
        %v321 = vmul.f32 %v282, %v313
        %v322 = vmul.f32 %v283, %v313
        %v323 = vmul.f32 %v284, %v313
        %v324 = vmul.f32 %v285, %v313
        %v325 = vmul.f32 %v286, %v313
        %v326 = vmul.f32 %v287, %v313
        %v327 = vmul.f32 %v288, %v313
        %v328 = vmul.f32 %v289, %v313
        %v329 = vmul.f32 %v290, %v313
        %v330 = vmul.f32 %v291, %v313
        %v331 = vmul.f32 %v292, %v313
        %v332 = vmul.f32 %v293, %v313
        %v333 = vmul.f32 %v294, %v313
        %v334 = vmul.f32 %v295, %v313
        %v335 = vmul.f32 %v296, %v313
        %v336 = vmul.f32 %v297, %v313
        %v337 = vmul.f32 %v298, %v313
        %v338 = vmul.f32 %v299, %v313
        %v339 = vmul.f32 %v300, %v313
        %v340 = vmul.f32 %v301, %v313
        %v341 = vmul.f32 %v302, %v313
        %v342 = vmul.f32 %v303, %v313
        %v343 = vmul.f32 %v304, %v313
        %v344 = vmul.f32 %v305, %v313
        %v345 = vmul.f32 %v306, %v313
        %v346 = vmul.f32 %v307, %v313
        %v347 = vld [vmem:[%s2] sm:$0x1]
        %v349 = vlaneseq
        %v350 = vshrl.u32 %v349, 7
        %v351 = vsub.s32 0, %v350
        %v352 = vrot.slane %v347, %v351
        %v354 = vadd.f32 %v315, %v352
        %v355 = vadd.f32 %v316, %v352
        %v356 = vadd.f32 %v317, %v352
        %v357 = vadd.f32 %v318, %v352
        %v358 = vadd.f32 %v319, %v352
        %v359 = vadd.f32 %v320, %v352
        %v360 = vadd.f32 %v321, %v352
        %v361 = vadd.f32 %v322, %v352
        %v362 = vadd.f32 %v323, %v352
        %v363 = vadd.f32 %v324, %v352
        %v364 = vadd.f32 %v325, %v352
        %v365 = vadd.f32 %v326, %v352
        %v366 = vadd.f32 %v327, %v352
        %v367 = vadd.f32 %v328, %v352
        %v368 = vadd.f32 %v329, %v352
        %v369 = vadd.f32 %v330, %v352
        %v370 = vadd.f32 %v331, %v352
        %v371 = vadd.f32 %v332, %v352
        %v372 = vadd.f32 %v333, %v352
        %v373 = vadd.f32 %v334, %v352
        %v374 = vadd.f32 %v335, %v352
        %v375 = vadd.f32 %v336, %v352
        %v376 = vadd.f32 %v337, %v352
        %v377 = vadd.f32 %v338, %v352
        %v378 = vadd.f32 %v339, %v352
        %v379 = vadd.f32 %v340, %v352
        %v380 = vadd.f32 %v341, %v352
        %v381 = vadd.f32 %v342, %v352
        %v382 = vadd.f32 %v343, %v352
        %v383 = vadd.f32 %v344, %v352
        %v384 = vadd.f32 %v345, %v352
        %v385 = vadd.f32 %v346, %v352
        %v386 = vmax.f32 %v354, 0.0
        %v387 = vmax.f32 %v355, 0.0
        %v388 = vmax.f32 %v356, 0.0
        %v389 = vmax.f32 %v357, 0.0
        %v390 = vmax.f32 %v358, 0.0
        %v391 = vmax.f32 %v359, 0.0
        %v392 = vmax.f32 %v360, 0.0
        %v393 = vmax.f32 %v361, 0.0
        %v394 = vmax.f32 %v362, 0.0
        %v395 = vmax.f32 %v363, 0.0
        %v396 = vmax.f32 %v364, 0.0
        %v397 = vmax.f32 %v365, 0.0
        %v398 = vmax.f32 %v366, 0.0
        %v399 = vmax.f32 %v367, 0.0
        %v400 = vmax.f32 %v368, 0.0
        %v401 = vmax.f32 %v369, 0.0
        %v402 = vmax.f32 %v370, 0.0
        %v403 = vmax.f32 %v371, 0.0
        %v404 = vmax.f32 %v372, 0.0
        %v405 = vmax.f32 %v373, 0.0
        %v406 = vmax.f32 %v374, 0.0
        %v407 = vmax.f32 %v375, 0.0
        %v408 = vmax.f32 %v376, 0.0
        %v409 = vmax.f32 %v377, 0.0
        %v410 = vmax.f32 %v378, 0.0
        %v411 = vmax.f32 %v379, 0.0
        %v412 = vmax.f32 %v380, 0.0
        %v413 = vmax.f32 %v381, 0.0
        %v414 = vmax.f32 %v382, 0.0
        %v415 = vmax.f32 %v383, 0.0
        %v416 = vmax.f32 %v384, 0.0
        %v417 = vmax.f32 %v385, 0.0
        %v418 = vld [vmem:[%s3] sm:$0xff]
        %v419 = vld [vmem:[%s3 + $0x8] sm:$0xff]
        %vm420 = vcmask 130048
        %v422 = vsel %vm420, %v386, 0
        %v425 = vsel %vm420, %v387, 0
        %v428 = vsel %vm420, %v388, 0
        %v431 = vsel %vm420, %v389, 0
        %v434 = vsel %vm420, %v390, 0
        %v437 = vsel %vm420, %v391, 0
        %v440 = vsel %vm420, %v392, 0
        %v443 = vsel %vm420, %v393, 0
        %v446 = vsel %vm420, %v394, 0
        %v449 = vsel %vm420, %v395, 0
        %v452 = vsel %vm420, %v396, 0
        %v455 = vsel %vm420, %v397, 0
        %v458 = vsel %vm420, %v398, 0
        %v461 = vsel %vm420, %v399, 0
        %v464 = vsel %vm420, %v400, 0
        %v467 = vsel %vm420, %v401, 0
        %v470 = vsel %vm420, %v402, 0
        %v473 = vsel %vm420, %v403, 0
        %v476 = vsel %vm420, %v404, 0
        %v479 = vsel %vm420, %v405, 0
        %v482 = vsel %vm420, %v406, 0
        %v485 = vsel %vm420, %v407, 0
        %v488 = vsel %vm420, %v408, 0
        %v491 = vsel %vm420, %v409, 0
        %v494 = vsel %vm420, %v410, 0
        %v497 = vsel %vm420, %v411, 0
        %v500 = vsel %vm420, %v412, 0
        %v503 = vsel %vm420, %v413, 0
        %v506 = vsel %vm420, %v414, 0
        %v509 = vsel %vm420, %v415, 0
        %v512 = vsel %vm420, %v416, 0
        %v515 = vsel %vm420, %v417, 0
        %517 = vmatprep.subr.mxu0 0.0
        %518 = vmatpush1.msra.mxu0 %v418
        %519 = vmatprep.subr.mxu0 0.0
        %520 = vmatpush1.msra.mxu0 %v419
        %521 = vmatprep.subr.mxu0 0.0
        %522 = vmatpush1.msra.mxu0 0.0
        %523 = vmatprep.subr.mxu0 0.0
        %524 = vmatpush1.msra.mxu0 0.0
        %525 = vmatprep.subr.mxu0 0.0
        %526 = vmatpush1.msra.mxu0 0.0
        %527 = vmatprep.subr.mxu0 0.0
        %528 = vmatpush1.msra.mxu0 0.0
        %529 = vmatprep.subr.mxu0 0.0
        %530 = vmatpush1.msra.mxu0 0.0
        %531 = vmatprep.subr.mxu0 0.0
        %532 = vmatpush1.msra.mxu0 0.0
        %533 = vmatprep.subr.mxu0 0.0
        %534 = vmatpush1.msra.mxu0 0.0
        %535 = vmatprep.subr.mxu0 0.0
        %536 = vmatpush1.msra.mxu0 0.0
        %537 = vmatprep.subr.mxu0 0.0
        %538 = vmatpush1.msra.mxu0 0.0
        %539 = vmatprep.subr.mxu0 0.0
        %540 = vmatpush1.msra.mxu0 0.0
        %541 = vmatprep.subr.mxu0 0.0
        %542 = vmatpush1.msra.mxu0 0.0
        %543 = vmatprep.subr.mxu0 0.0
        %544 = vmatpush1.msra.mxu0 0.0
        %545 = vmatprep.subr.mxu0 0.0
        %546 = vmatpush1.msra.mxu0 0.0
        %547 = vmatprep.subr.mxu0 0.0
        %548 = vmatpush1.msra.mxu0 0.0
        %549 = vmatprep.subr.mxu0 0.0
        %550 = vmatpush1.msra.mxu0 0.0
        %551 = vmatprep.subr.mxu0 0.0
        %552 = vmatpush1.msra.mxu0 0.0
        %553 = vmatprep.subr.mxu0 0.0
        %554 = vmatpush1.msra.mxu0 0.0
        %555 = vmatprep.subr.mxu0 0.0
        %556 = vmatpush1.msra.mxu0 0.0
        %557 = vmatprep.subr.mxu0 0.0
        %558 = vmatpush1.msra.mxu0 0.0
        %559 = vmatprep.subr.mxu0 0.0
        %560 = vmatpush1.msra.mxu0 0.0
        %561 = vmatprep.subr.mxu0 0.0
        %562 = vmatpush1.msra.mxu0 0.0
        %563 = vmatprep.subr.mxu0 0.0
        %564 = vmatpush1.msra.mxu0 0.0
        %565 = vmatprep.subr.mxu0 0.0
        %566 = vmatpush1.msra.mxu0 0.0
        %567 = vmatprep.subr.mxu0 0.0
        %568 = vmatpush1.msra.mxu0 0.0
        %569 = vmatprep.subr.mxu0 0.0
        %570 = vmatpush1.msra.mxu0 0.0
        %571 = vmatprep.subr.mxu0 0.0
        %572 = vmatpush1.msra.mxu0 0.0
        %573 = vmatprep.subr.mxu0 0.0
        %574 = vmatpush1.msra.mxu0 0.0
        %575 = vmatprep.subr.mxu0 0.0
        %576 = vmatpush1.msra.mxu0 0.0
        %577 = vmatprep.subr.mxu0 0.0
        %578 = vmatpush1.msra.mxu0 0.0
        %579 = vmatprep.subr.mxu0 0.0
        %580 = vmatpush1.msra.mxu0 0.0
        %581 = vmatprep.mubr.f32.mxu0 0.0
        %582 = vmatmul.mubr.f32.gmra.mrb[0].mxu0 %v422
        %v583 = vpop.f32.mrb[0].mxu0
        %v584 = vadd.f32 0.0, %v583
        %v585 = vpop.f32.mrb[0].mxu0
        %586 = vmatprep.mubr.f32.mxu0 0.0
        %587 = vmatmul.mubr.f32.gmra.mrb[0].mxu0 %v425
        %v588 = vpop.f32.mrb[0].mxu0
        %v589 = vadd.f32 0.0, %v588
        %v590 = vpop.f32.mrb[0].mxu0
        %591 = vmatprep.mubr.f32.mxu0 0.0
        %592 = vmatmul.mubr.f32.gmra.mrb[0].mxu0 %v428
        %v593 = vpop.f32.mrb[0].mxu0
        %v594 = vadd.f32 0.0, %v593
        %v595 = vpop.f32.mrb[0].mxu0
        %596 = vmatprep.mubr.f32.mxu0 0.0
        %597 = vmatmul.mubr.f32.gmra.mrb[0].mxu0 %v431
        %v598 = vpop.f32.mrb[0].mxu0
        %v599 = vadd.f32 0.0, %v598
        %v600 = vpop.f32.mrb[0].mxu0
        %601 = vmatprep.mubr.f32.mxu0 0.0
        %602 = vmatmul.mubr.f32.gmra.mrb[0].mxu0 %v434
        %v603 = vpop.f32.mrb[0].mxu0
        %v604 = vadd.f32 0.0, %v603
        %v605 = vpop.f32.mrb[0].mxu0
        %606 = vmatprep.mubr.f32.mxu0 0.0
        %607 = vmatmul.mubr.f32.gmra.mrb[0].mxu0 %v437
        %v608 = vpop.f32.mrb[0].mxu0
        %v609 = vadd.f32 0.0, %v608
        %v610 = vpop.f32.mrb[0].mxu0
        %611 = vmatprep.mubr.f32.mxu0 0.0
        %612 = vmatmul.mubr.f32.gmra.mrb[0].mxu0 %v440
        %v613 = vpop.f32.mrb[0].mxu0
        %v614 = vadd.f32 0.0, %v613
        %v615 = vpop.f32.mrb[0].mxu0
        %616 = vmatprep.mubr.f32.mxu0 0.0
        %617 = vmatmul.mubr.f32.gmra.mrb[0].mxu0 %v443
        %v618 = vpop.f32.mrb[0].mxu0
        %v619 = vadd.f32 0.0, %v618
        %v620 = vpop.f32.mrb[0].mxu0
        %621 = vmatprep.mubr.f32.mxu0 0.0
        %622 = vmatmul.mubr.f32.gmra.mrb[0].mxu0 %v446
        %v623 = vpop.f32.mrb[0].mxu0
        %v624 = vadd.f32 0.0, %v623
        %v625 = vpop.f32.mrb[0].mxu0
        %626 = vmatprep.mubr.f32.mxu0 0.0
        %627 = vmatmul.mubr.f32.gmra.mrb[0].mxu0 %v449
        %v628 = vpop.f32.mrb[0].mxu0
        %v629 = vadd.f32 0.0, %v628
        %v630 = vpop.f32.mrb[0].mxu0
        %631 = vmatprep.mubr.f32.mxu0 0.0
        %632 = vmatmul.mubr.f32.gmra.mrb[0].mxu0 %v452
        %v633 = vpop.f32.mrb[0].mxu0
        %v634 = vadd.f32 0.0, %v633
        %v635 = vpop.f32.mrb[0].mxu0
        %636 = vmatprep.mubr.f32.mxu0 0.0
        %637 = vmatmul.mubr.f32.gmra.mrb[0].mxu0 %v455
        %v638 = vpop.f32.mrb[0].mxu0
        %v639 = vadd.f32 0.0, %v638
        %v640 = vpop.f32.mrb[0].mxu0
        %641 = vmatprep.mubr.f32.mxu0 0.0
        %642 = vmatmul.mubr.f32.gmra.mrb[0].mxu0 %v458
        %v643 = vpop.f32.mrb[0].mxu0
        %v644 = vadd.f32 0.0, %v643
        %v645 = vpop.f32.mrb[0].mxu0
        %646 = vmatprep.mubr.f32.mxu0 0.0
        %647 = vmatmul.mubr.f32.gmra.mrb[0].mxu0 %v461
        %v648 = vpop.f32.mrb[0].mxu0
        %v649 = vadd.f32 0.0, %v648
        %v650 = vpop.f32.mrb[0].mxu0
        %651 = vmatprep.mubr.f32.mxu0 0.0
        %652 = vmatmul.mubr.f32.gmra.mrb[0].mxu0 %v464
        %v653 = vpop.f32.mrb[0].mxu0
        %v654 = vadd.f32 0.0, %v653
        %v655 = vpop.f32.mrb[0].mxu0
        %656 = vmatprep.mubr.f32.mxu0 0.0
        %657 = vmatmul.mubr.f32.gmra.mrb[0].mxu0 %v467
        %v658 = vpop.f32.mrb[0].mxu0
        %v659 = vadd.f32 0.0, %v658
        %v660 = vpop.f32.mrb[0].mxu0
        %661 = vmatprep.mubr.f32.mxu0 0.0
        %662 = vmatmul.mubr.f32.gmra.mrb[0].mxu0 %v470
        %v663 = vpop.f32.mrb[0].mxu0
        %v664 = vadd.f32 0.0, %v663
        %v665 = vpop.f32.mrb[0].mxu0
        %666 = vmatprep.mubr.f32.mxu0 0.0
        %667 = vmatmul.mubr.f32.gmra.mrb[0].mxu0 %v473
        %v668 = vpop.f32.mrb[0].mxu0
        %v669 = vadd.f32 0.0, %v668
        %v670 = vpop.f32.mrb[0].mxu0
        %671 = vmatprep.mubr.f32.mxu0 0.0
        %672 = vmatmul.mubr.f32.gmra.mrb[0].mxu0 %v476
        %v673 = vpop.f32.mrb[0].mxu0
        %v674 = vadd.f32 0.0, %v673
        %v675 = vpop.f32.mrb[0].mxu0
        %676 = vmatprep.mubr.f32.mxu0 0.0
        %677 = vmatmul.mubr.f32.gmra.mrb[0].mxu0 %v479
        %v678 = vpop.f32.mrb[0].mxu0
        %v679 = vadd.f32 0.0, %v678
        %v680 = vpop.f32.mrb[0].mxu0
        %681 = vmatprep.mubr.f32.mxu0 0.0
        %682 = vmatmul.mubr.f32.gmra.mrb[0].mxu0 %v482
        %v683 = vpop.f32.mrb[0].mxu0
        %v684 = vadd.f32 0.0, %v683
        %v685 = vpop.f32.mrb[0].mxu0
        %686 = vmatprep.mubr.f32.mxu0 0.0
        %687 = vmatmul.mubr.f32.gmra.mrb[0].mxu0 %v485
        %v688 = vpop.f32.mrb[0].mxu0
        %v689 = vadd.f32 0.0, %v688
        %v690 = vpop.f32.mrb[0].mxu0
        %691 = vmatprep.mubr.f32.mxu0 0.0
        %692 = vmatmul.mubr.f32.gmra.mrb[0].mxu0 %v488
        %v693 = vpop.f32.mrb[0].mxu0
        %v694 = vadd.f32 0.0, %v693
        %v695 = vpop.f32.mrb[0].mxu0
        %696 = vmatprep.mubr.f32.mxu0 0.0
        %697 = vmatmul.mubr.f32.gmra.mrb[0].mxu0 %v491
        %v698 = vpop.f32.mrb[0].mxu0
        %v699 = vadd.f32 0.0, %v698
        %v700 = vpop.f32.mrb[0].mxu0
        %701 = vmatprep.mubr.f32.mxu0 0.0
        %702 = vmatmul.mubr.f32.gmra.mrb[0].mxu0 %v494
        %v703 = vpop.f32.mrb[0].mxu0
        %v704 = vadd.f32 0.0, %v703
        %v705 = vpop.f32.mrb[0].mxu0
        %706 = vmatprep.mubr.f32.mxu0 0.0
        %707 = vmatmul.mubr.f32.gmra.mrb[0].mxu0 %v497
        %v708 = vpop.f32.mrb[0].mxu0
        %v709 = vadd.f32 0.0, %v708
        %v710 = vpop.f32.mrb[0].mxu0
        %711 = vmatprep.mubr.f32.mxu0 0.0
        %712 = vmatmul.mubr.f32.gmra.mrb[0].mxu0 %v500
        %v713 = vpop.f32.mrb[0].mxu0
        %v714 = vadd.f32 0.0, %v713
        %v715 = vpop.f32.mrb[0].mxu0
        %716 = vmatprep.mubr.f32.mxu0 0.0
        %717 = vmatmul.mubr.f32.gmra.mrb[0].mxu0 %v503
        %v718 = vpop.f32.mrb[0].mxu0
        %v719 = vadd.f32 0.0, %v718
        %v720 = vpop.f32.mrb[0].mxu0
        %721 = vmatprep.mubr.f32.mxu0 0.0
        %722 = vmatmul.mubr.f32.gmra.mrb[0].mxu0 %v506
        %v723 = vpop.f32.mrb[0].mxu0
        %v724 = vadd.f32 0.0, %v723
        %v725 = vpop.f32.mrb[0].mxu0
        %726 = vmatprep.mubr.f32.mxu0 0.0
        %727 = vmatmul.mubr.f32.gmra.mrb[0].mxu0 %v509
        %v728 = vpop.f32.mrb[0].mxu0
        %v729 = vadd.f32 0.0, %v728
        %v730 = vpop.f32.mrb[0].mxu0
        %731 = vmatprep.mubr.f32.mxu0 0.0
        %732 = vmatmul.mubr.f32.gmra.mrb[0].mxu0 %v512
        %v733 = vpop.f32.mrb[0].mxu0
        %v734 = vadd.f32 0.0, %v733
        %v735 = vpop.f32.mrb[0].mxu0
        %736 = vmatprep.mubr.f32.mxu0 0.0
        %737 = vmatmul.mubr.f32.gmra.mrb[0].mxu0 %v515
        %v738 = vpop.f32.mrb[0].mxu0
        %v739 = vadd.f32 0.0, %v738
        %v740 = vpop.f32.mrb[0].mxu0
        %741 = vdwg.mxu0
        %vm742 = vcmask 261120
        %743 = vst.msk [vmem:[%s274] sm:$0xff] %vm742, %v584
        %744 = vst.msk [vmem:[%s274 + $0x8] sm:$0xff] %vm742, %v589
        %745 = vst.msk [vmem:[%s274 + $0x10] sm:$0xff] %vm742, %v594
        %746 = vst.msk [vmem:[%s274 + $0x18] sm:$0xff] %vm742, %v599
        %747 = vst.msk [vmem:[%s274 + $0x20] sm:$0xff] %vm742, %v604
        %748 = vst.msk [vmem:[%s274 + $0x28] sm:$0xff] %vm742, %v609
        %749 = vst.msk [vmem:[%s274 + $0x30] sm:$0xff] %vm742, %v614
        %750 = vst.msk [vmem:[%s274 + $0x38] sm:$0xff] %vm742, %v619
        %751 = vst.msk [vmem:[%s274 + $0x40] sm:$0xff] %vm742, %v624
        %752 = vst.msk [vmem:[%s274 + $0x48] sm:$0xff] %vm742, %v629
        %753 = vst.msk [vmem:[%s274 + $0x50] sm:$0xff] %vm742, %v634
        %754 = vst.msk [vmem:[%s274 + $0x58] sm:$0xff] %vm742, %v639
        %755 = vst.msk [vmem:[%s274 + $0x60] sm:$0xff] %vm742, %v644
        %756 = vst.msk [vmem:[%s274 + $0x68] sm:$0xff] %vm742, %v649
        %757 = vst.msk [vmem:[%s274 + $0x70] sm:$0xff] %vm742, %v654
        %758 = vst.msk [vmem:[%s274 + $0x78] sm:$0xff] %vm742, %v659
        %759 = vst.msk [vmem:[%s274 + $0x80] sm:$0xff] %vm742, %v664
        %760 = vst.msk [vmem:[%s274 + $0x88] sm:$0xff] %vm742, %v669
        %761 = vst.msk [vmem:[%s274 + $0x90] sm:$0xff] %vm742, %v674
        %762 = vst.msk [vmem:[%s274 + $0x98] sm:$0xff] %vm742, %v679
        %763 = vst.msk [vmem:[%s274 + $0xa0] sm:$0xff] %vm742, %v684
        %764 = vst.msk [vmem:[%s274 + $0xa8] sm:$0xff] %vm742, %v689
        %765 = vst.msk [vmem:[%s274 + $0xb0] sm:$0xff] %vm742, %v694
        %766 = vst.msk [vmem:[%s274 + $0xb8] sm:$0xff] %vm742, %v699
        %767 = vst.msk [vmem:[%s274 + $0xc0] sm:$0xff] %vm742, %v704
        %768 = vst.msk [vmem:[%s274 + $0xc8] sm:$0xff] %vm742, %v709
        %769 = vst.msk [vmem:[%s274 + $0xd0] sm:$0xff] %vm742, %v714
        %770 = vst.msk [vmem:[%s274 + $0xd8] sm:$0xff] %vm742, %v719
        %771 = vst.msk [vmem:[%s274 + $0xe0] sm:$0xff] %vm742, %v724
        %772 = vst.msk [vmem:[%s274 + $0xe8] sm:$0xff] %vm742, %v729
        %773 = vst.msk [vmem:[%s274 + $0xf0] sm:$0xff] %vm742, %v734
        %774 = vst.msk [vmem:[%s274 + $0xf8] sm:$0xff] %vm742, %v739
        %v775 = vsel %vm742, %v584, 0.0
        %v776 = vsel %vm742, %v589, 0.0
        %v777 = vadd.f32 %v775, %v776
        %v778 = vsel %vm742, %v594, 0.0
        %v779 = vadd.f32 %v777, %v778
        %v780 = vsel %vm742, %v599, 0.0
        %v781 = vadd.f32 %v779, %v780
        %v782 = vsel %vm742, %v604, 0.0
        %v783 = vadd.f32 %v781, %v782
        %v784 = vsel %vm742, %v609, 0.0
        %v785 = vadd.f32 %v783, %v784
        %v786 = vsel %vm742, %v614, 0.0
        %v787 = vadd.f32 %v785, %v786
        %v788 = vsel %vm742, %v619, 0.0
        %v789 = vadd.f32 %v787, %v788
        %v790 = vsel %vm742, %v624, 0.0
        %v791 = vadd.f32 %v789, %v790
        %v792 = vsel %vm742, %v629, 0.0
        %v793 = vadd.f32 %v791, %v792
        %v794 = vsel %vm742, %v634, 0.0
        %v795 = vadd.f32 %v793, %v794
        %v796 = vsel %vm742, %v639, 0.0
        %v797 = vadd.f32 %v795, %v796
        %v798 = vsel %vm742, %v644, 0.0
        %v799 = vadd.f32 %v797, %v798
        %v800 = vsel %vm742, %v649, 0.0
        %v801 = vadd.f32 %v799, %v800
        %v802 = vsel %vm742, %v654, 0.0
        %v803 = vadd.f32 %v801, %v802
        %v804 = vsel %vm742, %v659, 0.0
        %v805 = vadd.f32 %v803, %v804
        %v806 = vsel %vm742, %v664, 0.0
        %v807 = vadd.f32 %v805, %v806
        %v808 = vsel %vm742, %v669, 0.0
        %v809 = vadd.f32 %v807, %v808
        %v810 = vsel %vm742, %v674, 0.0
        %v811 = vadd.f32 %v809, %v810
        %v812 = vsel %vm742, %v679, 0.0
        %v813 = vadd.f32 %v811, %v812
        %v814 = vsel %vm742, %v684, 0.0
        %v815 = vadd.f32 %v813, %v814
        %v816 = vsel %vm742, %v689, 0.0
        %v817 = vadd.f32 %v815, %v816
        %v818 = vsel %vm742, %v694, 0.0
        %v819 = vadd.f32 %v817, %v818
        %v820 = vsel %vm742, %v699, 0.0
        %v821 = vadd.f32 %v819, %v820
        %v822 = vsel %vm742, %v704, 0.0
        %v823 = vadd.f32 %v821, %v822
        %v824 = vsel %vm742, %v709, 0.0
        %v825 = vadd.f32 %v823, %v824
        %v826 = vsel %vm742, %v714, 0.0
        %v827 = vadd.f32 %v825, %v826
        %v828 = vsel %vm742, %v719, 0.0
        %v829 = vadd.f32 %v827, %v828
        %v830 = vsel %vm742, %v724, 0.0
        %v831 = vadd.f32 %v829, %v830
        %v832 = vsel %vm742, %v729, 0.0
        %v833 = vadd.f32 %v831, %v832
        %v834 = vsel %vm742, %v734, 0.0
        %v835 = vadd.f32 %v833, %v834
        %v836 = vsel %vm742, %v739, 0.0
        %v837 = vadd.f32 %v835, %v836
        %v838 = vrot.slane %v837, 4
        %v839 = vadd.f32 %v837, %v838
        %v840 = vrot.slane %v839, 2
        %v841 = vadd.f32 %v839, %v840
        %v842 = vrot.slane %v841, 1
        %v843 = vadd.f32 %v841, %v842
        %v844 = vmul.f32 %v584, %v584
        %v845 = vmul.f32 %v589, %v589
        %v846 = vmul.f32 %v594, %v594
        %v847 = vmul.f32 %v599, %v599
        %v848 = vmul.f32 %v604, %v604
        %v849 = vmul.f32 %v609, %v609
        %v850 = vmul.f32 %v614, %v614
        %v851 = vmul.f32 %v619, %v619
        %v852 = vmul.f32 %v624, %v624
        %v853 = vmul.f32 %v629, %v629
        %v854 = vmul.f32 %v634, %v634
        %v855 = vmul.f32 %v639, %v639
        %v856 = vmul.f32 %v644, %v644
        %v857 = vmul.f32 %v649, %v649
        %v858 = vmul.f32 %v654, %v654
        %v859 = vmul.f32 %v659, %v659
        %v860 = vmul.f32 %v664, %v664
        %v861 = vmul.f32 %v669, %v669
        %v862 = vmul.f32 %v674, %v674
        %v863 = vmul.f32 %v679, %v679
        %v864 = vmul.f32 %v684, %v684
        %v865 = vmul.f32 %v689, %v689
        %v866 = vmul.f32 %v694, %v694
        %v867 = vmul.f32 %v699, %v699
        %v868 = vmul.f32 %v704, %v704
        %v869 = vmul.f32 %v709, %v709
        %v870 = vmul.f32 %v714, %v714
        %v871 = vmul.f32 %v719, %v719
        %v872 = vmul.f32 %v724, %v724
        %v873 = vmul.f32 %v729, %v729
        %v874 = vmul.f32 %v734, %v734
        %v875 = vmul.f32 %v739, %v739
        %v876 = vsel %vm742, %v844, 0.0
        %v877 = vsel %vm742, %v845, 0.0
        %v878 = vadd.f32 %v876, %v877
        %v879 = vsel %vm742, %v846, 0.0
        %v880 = vadd.f32 %v878, %v879
        %v881 = vsel %vm742, %v847, 0.0
        %v882 = vadd.f32 %v880, %v881
        %v883 = vsel %vm742, %v848, 0.0
        %v884 = vadd.f32 %v882, %v883
        %v885 = vsel %vm742, %v849, 0.0
        %v886 = vadd.f32 %v884, %v885
        %v887 = vsel %vm742, %v850, 0.0
        %v888 = vadd.f32 %v886, %v887
        %v889 = vsel %vm742, %v851, 0.0
        %v890 = vadd.f32 %v888, %v889
        %v891 = vsel %vm742, %v852, 0.0
        %v892 = vadd.f32 %v890, %v891
        %v893 = vsel %vm742, %v853, 0.0
        %v894 = vadd.f32 %v892, %v893
        %v895 = vsel %vm742, %v854, 0.0
        %v896 = vadd.f32 %v894, %v895
        %v897 = vsel %vm742, %v855, 0.0
        %v898 = vadd.f32 %v896, %v897
        %v899 = vsel %vm742, %v856, 0.0
        %v900 = vadd.f32 %v898, %v899
        %v901 = vsel %vm742, %v857, 0.0
        %v902 = vadd.f32 %v900, %v901
        %v903 = vsel %vm742, %v858, 0.0
        %v904 = vadd.f32 %v902, %v903
        %v905 = vsel %vm742, %v859, 0.0
        %v906 = vadd.f32 %v904, %v905
        %v907 = vsel %vm742, %v860, 0.0
        %v908 = vadd.f32 %v906, %v907
        %v909 = vsel %vm742, %v861, 0.0
        %v910 = vadd.f32 %v908, %v909
        %v911 = vsel %vm742, %v862, 0.0
        %v912 = vadd.f32 %v910, %v911
        %v913 = vsel %vm742, %v863, 0.0
        %v914 = vadd.f32 %v912, %v913
        %v915 = vsel %vm742, %v864, 0.0
        %v916 = vadd.f32 %v914, %v915
        %v917 = vsel %vm742, %v865, 0.0
        %v918 = vadd.f32 %v916, %v917
        %v919 = vsel %vm742, %v866, 0.0
        %v920 = vadd.f32 %v918, %v919
        %v921 = vsel %vm742, %v867, 0.0
        %v922 = vadd.f32 %v920, %v921
        %v923 = vsel %vm742, %v868, 0.0
        %v924 = vadd.f32 %v922, %v923
        %v925 = vsel %vm742, %v869, 0.0
        %v926 = vadd.f32 %v924, %v925
        %v927 = vsel %vm742, %v870, 0.0
        %v928 = vadd.f32 %v926, %v927
        %v929 = vsel %vm742, %v871, 0.0
        %v930 = vadd.f32 %v928, %v929
        %v931 = vsel %vm742, %v872, 0.0
        %v932 = vadd.f32 %v930, %v931
        %v933 = vsel %vm742, %v873, 0.0
        %v934 = vadd.f32 %v932, %v933
        %v935 = vsel %vm742, %v874, 0.0
        %v936 = vadd.f32 %v934, %v935
        %v937 = vsel %vm742, %v875, 0.0
        %v938 = vadd.f32 %v936, %v937
        %v939 = vrot.slane %v938, 4
        %v940 = vadd.f32 %v938, %v939
        %v941 = vrot.slane %v940, 2
        %v942 = vadd.f32 %v940, %v941
        %v943 = vrot.slane %v942, 1
        %v944 = vadd.f32 %v942, %v943
        %v945 = vlaneseq
        %v946 = vshrl.u32 %v945, 7
        %vm947 = vcmp.eq.s32.totalorder %v946, 0
        %v948 = vsel %vm947, %v843, 0.0
        %949 = vst.msk [vmem:[%s256] sm:$0xff] %vm742, %v948
        %v950 = vsel %vm947, %v944, 0.0
        %951 = vst.msk [vmem:[%s263] sm:$0xff] %vm742, %v950
        %s952 = smul.u32 32, %s24
        %p953 = scmp.lt.s32.totalorder %s952, 63
        %s954 = scalar_select %p953, %s952, 63
        %s955 = smul.addr %s954, 8
        %s956 = scalar_lea.vmem %s4, %s955
        %s957 = sand.u32 %s147, 1
        %s958 = scalar_lea.sflag [#allocation3], %s957
        %s959 = sand.u32 %s147, 1
        %s960 = smul.addr %s959, 8
        %s961 = scalar_lea.vmem [#allocation2], %s960
        %s962 = sand.u32 %s173, 1
        %s963 = scalar_lea.sflag [#allocation5], %s962
        %s964 = sand.u32 %s173, 1
        %s965 = smul.addr %s964, 8
        %s966 = scalar_lea.vmem [#allocation4], %s965
        // Predicated region
        $region37: #{tpu_custom_call.1} parent=35 // pred_check
          %p967 = pneg %p131
        $region38: #{tpu_custom_call.1} parent=35 // pred_check_branch
          %969 = sbr.rel (%p967) target = $region40
        $region39: #{tpu_custom_call.1} parent=35 // pred_region
          %s970 = smul.u32 32, %s24
        $region40: #{tpu_custom_call.1} parent=35 // pred_fallthru
          _
        // Predicated region
        $region41: #{tpu_custom_call.1} parent=35 // pred_check
          %p971 = pneg %p157
        $region42: #{tpu_custom_call.1} parent=35 // pred_check_branch
          %973 = sbr.rel (%p971) target = $region44
        $region43: #{tpu_custom_call.1} parent=35 // pred_region
          %s975 = ssub.s32 128, 128
          %976 = vsyncadd %s958, %s975
          %s977 = smul.addr %s24, 128
          %s978 = scalar_lea.hbm %s5, %s977
          %s980 = sshll.u32 %s961, 4
          %s981 = int_to_ptr.vmem [resolvable:$true] %s980
          %983 = dma.vmem_to_hbm [thread:$0]  %s981, 128, %s978, %s958
        $region44: #{tpu_custom_call.1} parent=35 // pred_fallthru
          _
        // Predicated region
        $region45: #{tpu_custom_call.1} parent=35 // pred_check
          %p984 = pneg %p183
        $region46: #{tpu_custom_call.1} parent=35 // pred_check_branch
          %986 = sbr.rel (%p984) target = $region48
        $region47: #{tpu_custom_call.1} parent=35 // pred_region
          %s988 = ssub.s32 128, 128
          %989 = vsyncadd %s963, %s988
          %s990 = smul.addr %s24, 128
          %s991 = scalar_lea.hbm %s6, %s990
          %s993 = sshll.u32 %s966, 4
          %s994 = int_to_ptr.vmem [resolvable:$true] %s993
          %996 = dma.vmem_to_hbm [thread:$0]  %s994, 128, %s991, %s963
        $region48: #{tpu_custom_call.1} parent=35 // pred_fallthru
          _
      $region36: #{tpu_custom_call.1} parent=5 // pred_fallthru
        _
      %p997 = scmp.le.s32.totalorder 2, %s19
      // Predicated region
      $region49: #{tpu_custom_call.1} parent=5 // pred_check
        %p998 = pneg %p997
      $region50: #{tpu_custom_call.1} parent=5 // pred_check_branch
        %1000 = sbr.rel (%p998) target = $region52
      $region51: #{tpu_custom_call.1} parent=5 // pred_region
        %s1001 = ssub.s32 %s19, 2
        // Predicated region
        $region53: #{tpu_custom_call.1} parent=51 // pred_check
          %p1002 = pneg %p137
        $region54: #{tpu_custom_call.1} parent=51 // pred_check_branch
          %1004 = sbr.rel (%p1002) target = $region56
        $region55: #{tpu_custom_call.1} parent=51 // pred_region
          %s1005 = smul.u32 32, %s25
          %p1006 = scmp.lt.s32.totalorder %s1005, 63
          %s1007 = scalar_select %p1006, %s1005, 63
          %s1008 = smul.addr %s1007, 8
          %s1009 = scalar_lea.vmem %s4, %s1008
        $region56: #{tpu_custom_call.1} parent=51 // pred_fallthru
          _
        // Predicated region
        $region57: #{tpu_custom_call.1} parent=51 // pred_check
          %p1010 = pneg %p163
        $region58: #{tpu_custom_call.1} parent=51 // pred_check_branch
          %1012 = sbr.rel (%p1010) target = $region60
        $region59: #{tpu_custom_call.1} parent=51 // pred_region
          %s1013 = sand.u32 %s148, 1
          %s1014 = scalar_lea.sflag [#allocation3], %s1013
          %s1015 = sand.u32 %s148, 1
          %s1016 = smul.addr %s1015, 8
          %s1017 = scalar_lea.vmem [#allocation2], %s1016
          %1018 = dma.done %s1014, 128
        $region60: #{tpu_custom_call.1} parent=51 // pred_fallthru
          _
        // Predicated region
        $region61: #{tpu_custom_call.1} parent=51 // pred_check
          %p1019 = pneg %p189
        $region62: #{tpu_custom_call.1} parent=51 // pred_check_branch
          %1021 = sbr.rel (%p1019) target = $region64
        $region63: #{tpu_custom_call.1} parent=51 // pred_region
          %s1022 = sand.u32 %s174, 1
          %s1023 = scalar_lea.sflag [#allocation5], %s1022
          %s1024 = sand.u32 %s174, 1
          %s1025 = smul.addr %s1024, 8
          %s1026 = scalar_lea.vmem [#allocation4], %s1025
          %1027 = dma.done %s1023, 128
        $region64: #{tpu_custom_call.1} parent=51 // pred_fallthru
          _
      $region52: #{tpu_custom_call.1} parent=5 // pred_fallthru
        _
    $region6: #{tpu_custom_call.1} parent=1 // loop_footer
      %s23 = sadd.s32 1, %s19
    $region7: #{tpu_custom_call.1} parent=1 // loop_footer_branch
      %18 = sbr.rel target = $region3
    $region8: #{tpu_custom_call.1} parent=1 // loop_exit
      _
    %1028 = vsyncpa [#allocation3], 1
    %s1029 = scalar_lea.sflag [#allocation3], 1
    %1030 = vsyncpa %s1029, 1
    %1031 = vsyncpa [#allocation5], 1
    %s1032 = scalar_lea.sflag [#allocation5], 1
    %1033 = vsyncpa %s1032, 1

</llo_original>
